<compile_context>
chip_gen: v6e
topology: v6e:2x2x1
jax: 0.10.0
libtpu: 0.0.40
codegen_flags: <defaults>
</compile_context>

<pallas_src>
import jax
import jax.numpy as jnp
from jax.experimental import pallas as pl
from jax.experimental.pallas import tpu as pltpu


MAX_TILE_B = 2048   # batch-tile upper bound


def _round_up(x: int, m: int) -> int:
    return ((x + m - 1) // m) * m


def _cdiv(a: int, b: int) -> int:
    return (a + b - 1) // b


def fcn_kernel(x_ref, w1_ref, b1_ref, w2_ref, b2_ref, o_ref):
    # fc1: bf16 MXU matmul with f32 accumulation; bias fused; ReLU on the VPU.
    h = b1_ref[...] + jnp.dot(x_ref[...], w1_ref[...],
                              preferred_element_type=jnp.float32)
    h = jnp.maximum(h, 0.0)
    # fc2 + Sigmoid (exp/recip land on the EUP slot, effectively free here).
    z = b2_ref[...] + jnp.dot(h.astype(w2_ref.dtype), w2_ref[...],
                              preferred_element_type=jnp.float32)
    o_ref[...] = jax.nn.sigmoid(z).astype(o_ref.dtype)


def prepare_params(w1, b1, w2, b2, dtype=jnp.bfloat16):
    """One-time layout transform (do NOT call per-forward).

    PyTorch Linear layout (out, in) -> (in, out), cast to bf16 (MXU fast path,
    half the HBM traffic). Biases stay f32 and are fused into the f32 accumulate.
    """
    w1_t = w1.T.astype(dtype)                       # (in, hid)
    b1_r = b1.astype(jnp.float32).reshape(1, -1)    # (1, hid)
    w2_t = w2.T.astype(dtype)                       # (hid, out)
    b2_r = b2.astype(jnp.float32).reshape(1, -1)    # (1, out)
    return w1_t, b1_r, w2_t, b2_r


@jax.jit
def fcn_forward(x, w1_t, b1_r, w2_t, b2_r):
    """x: (B, in_size). Prepared params from prepare_params(). Returns (B, out) f32."""
    B, in_size = x.shape
    assert w1_t.shape[0] == in_size, "x feature dim does not match fc1 weights"
    hid = w1_t.shape[1]
    assert w2_t.shape[0] == hid and b1_r.shape == (1, hid)
    out_size = w2_t.shape[1]
    assert b2_r.shape == (1, out_size)

    # Balanced batch tiling: <8 rows of ragged padding per tile, and >=2 grid
    # steps (when there is enough work) so v7x's two TensorCores both get blocks.
    n_tiles = _cdiv(B, MAX_TILE_B)
    if n_tiles < 2 and B >= 16:
        n_tiles = 2
    tile_b = _round_up(_cdiv(B, n_tiles), 8)
    b_pad = n_tiles * tile_b

    x_p = x.astype(w1_t.dtype)
    if b_pad != B:
        x_p = jnp.pad(x_p, ((0, b_pad - B), (0, 0)))   # batch-only padding

    wbytes = w1_t.dtype.itemsize
    cost = pl.CostEstimate(
        flops=2 * b_pad * (in_size * hid + hid * out_size),
        transcendentals=b_pad * out_size,                      # sigmoid exp
        bytes_accessed=(b_pad * in_size * wbytes               # x read
                        + (in_size * hid + hid * out_size) * wbytes   # weights
                        + (hid + out_size) * 4                 # biases
                        + b_pad * out_size * 4),               # output write
    )

    out_padded = pl.pallas_call(
        fcn_kernel,
        out_shape=jax.ShapeDtypeStruct((b_pad, out_size), jnp.float32),
        grid=(n_tiles,),
        in_specs=[
            pl.BlockSpec((tile_b, in_size), lambda i: (i, 0)),   # x: tiled over batch
            pl.BlockSpec((in_size, hid), lambda i: (0, 0)),      # W1: resident in VMEM
            pl.BlockSpec((1, hid), lambda i: (0, 0)),            # b1: resident
            pl.BlockSpec((hid, out_size), lambda i: (0, 0)),     # W2: resident
            pl.BlockSpec((1, out_size), lambda i: (0, 0)),       # b2: resident
        ],
        out_specs=pl.BlockSpec((tile_b, out_size), lambda i: (i, 0)),
        compiler_params=pltpu.CompilerParams(
            dimension_semantics=("parallel",),       # megacore-shard batch on v7x
            vmem_limit_bytes=32 * 1024 * 1024,       # safe on v5e/v6e/v7x
        ),
        cost_estimate=cost,
    )(x_p, w1_t, b1_r, w2_t, b2_r)

    return out_padded if b_pad == B else out_padded[:B]


if __name__ == "__main__":
    # Small shapes consistent with the module.
    batch, input_size, hidden_size, output_size = 8, 16, 32, 8

    key = jax.random.PRNGKey(0)
    kx, kw1, kb1, kw2, kb2 = jax.random.split(key, 5)

    x = jax.random.normal(kx, (batch, input_size), dtype=jnp.float32)
    # PyTorch Linear layout: weight (out, in), bias (out,).
    w1 = jax.random.normal(kw1, (hidden_size, input_size), dtype=jnp.float32) * 0.1
    b1 = jax.random.normal(kb1, (hidden_size,), dtype=jnp.float32) * 0.1
    w2 = jax.random.normal(kw2, (output_size, hidden_size), dtype=jnp.float32) * 0.1
    b2 = jax.random.normal(kb2, (output_size,), dtype=jnp.float32) * 0.1

    params = prepare_params(w1, b1, w2, b2)          # one-time layout transform (bf16)
    out = fcn_forward(x, *params)
    out = jax.block_until_ready(out)

    # Pure-JAX f32 reference of the same forward pass (bf16 kernel -> loose tol).
    ref = jax.nn.sigmoid(jnp.maximum(x @ w1.T + b1, 0.0) @ w2.T + b2)
    assert out.shape == (batch, output_size)
    assert jnp.allclose(out, ref, atol=2e-2), "mismatch vs reference"

    print("KERNEL_OK")
</pallas_src>

<mosaic_0001>
module attributes {stable_mosaic.version = 11 : i64} {
  func.func @fcn_kernel(%arg0: i32, %arg1: memref<8x16xbf16, #tpu.memory_space<vmem>>, %arg2: memref<16x32xbf16, #tpu.memory_space<vmem>>, %arg3: memref<1x32xf32, #tpu.memory_space<vmem>>, %arg4: memref<32x8xbf16, #tpu.memory_space<vmem>>, %arg5: memref<1x8xf32, #tpu.memory_space<vmem>>, %arg6: memref<8x8xf32, #tpu.memory_space<vmem>>) attributes {dimension_semantics = [#tpu.dimension_semantics<parallel>], iteration_bounds = array<i64: 1>, scalar_prefetch = 0 : i64, scratch_operands = 0 : i64, tpu.core_type = #tpu.core_type<tc>, window_params = [{transform_indices = @transform_0, window_bounds = array<i64: 8, 16>}, {pipeline_mode = #tpu.pipeline_mode<synchronous>, transform_indices = @transform_1, window_bounds = array<i64: 16, 32>}, {pipeline_mode = #tpu.pipeline_mode<synchronous>, transform_indices = @transform_2, window_bounds = array<i64: 1, 32>}, {pipeline_mode = #tpu.pipeline_mode<synchronous>, transform_indices = @transform_3, window_bounds = array<i64: 32, 8>}, {pipeline_mode = #tpu.pipeline_mode<synchronous>, transform_indices = @transform_4, window_bounds = array<i64: 1, 8>}, {transform_indices = @transform_5, window_bounds = array<i64: 8, 8>}]} {
    %c0 = arith.constant 0 : index
    %c0_0 = arith.constant 0 : index
    %0 = vector.load %arg3[%c0, %c0_0] : memref<1x32xf32, #tpu.memory_space<vmem>>, vector<1x32xf32>
    %c0_1 = arith.constant 0 : index
    %c0_2 = arith.constant 0 : index
    %1 = vector.load %arg1[%c0_1, %c0_2] : memref<8x16xbf16, #tpu.memory_space<vmem>>, vector<8x16xbf16>
    %c0_3 = arith.constant 0 : index
    %c0_4 = arith.constant 0 : index
    %2 = vector.load %arg2[%c0_3, %c0_4] : memref<16x32xbf16, #tpu.memory_space<vmem>>, vector<16x32xbf16>
    %cst = arith.constant dense<0.000000e+00> : vector<8x32xf32>
    %3 = tpu.matmul %1, %2, %cst {dimension_numbers = #tpu.dot_dimension_numbers<[1], [0], [0], [1], [0, 0, 1, 1], [], []>} : vector<8x16xbf16>, vector<16x32xbf16>, vector<8x32xf32> -> vector<8x32xf32>
    %4 = vector.broadcast %0 : vector<1x32xf32> to vector<8x32xf32>
    %5 = arith.addf %4, %3 : vector<8x32xf32>
    %cst_5 = arith.constant 0.000000e+00 : f32
    %6 = vector.broadcast %cst_5 : f32 to vector<8x32xf32>
    %7 = arith.maximumf %5, %6 : vector<8x32xf32>
    %c0_6 = arith.constant 0 : index
    %c0_7 = arith.constant 0 : index
    %8 = vector.load %arg5[%c0_6, %c0_7] : memref<1x8xf32, #tpu.memory_space<vmem>>, vector<1x8xf32>
    %9 = arith.truncf %7 : vector<8x32xf32> to vector<8x32xbf16>
    %c0_8 = arith.constant 0 : index
    %c0_9 = arith.constant 0 : index
    %10 = vector.load %arg4[%c0_8, %c0_9] : memref<32x8xbf16, #tpu.memory_space<vmem>>, vector<32x8xbf16>
    %cst_10 = arith.constant dense<0.000000e+00> : vector<8x8xf32>
    %11 = tpu.matmul %9, %10, %cst_10 {dimension_numbers = #tpu.dot_dimension_numbers<[1], [0], [0], [1], [0, 0, 1, 1], [], []>} : vector<8x32xbf16>, vector<32x8xbf16>, vector<8x8xf32> -> vector<8x8xf32>
    %12 = vector.broadcast %8 : vector<1x8xf32> to vector<8x8xf32>
    %13 = arith.addf %12, %11 : vector<8x8xf32>
    %14 = arith.negf %13 : vector<8x8xf32>
    %15 = math.exp %14 : vector<8x8xf32>
    %cst_11 = arith.constant 1.000000e+00 : f32
    %16 = vector.broadcast %cst_11 : f32 to vector<8x8xf32>
    %17 = arith.addf %16, %15 : vector<8x8xf32>
    %18 = arith.divf %16, %17 : vector<8x8xf32>
    %c0_12 = arith.constant 0 : index
    %c0_13 = arith.constant 0 : index
    %19 = vector.load %arg6[%c0_12, %c0_13] : memref<8x8xf32, #tpu.memory_space<vmem>>, vector<8x8xf32>
    tpu.vector_store %arg6[%c0_12, %c0_13], %18 {strides = array<i32>} : memref<8x8xf32, #tpu.memory_space<vmem>>, vector<8x8xf32>,
    return
  }
  func.func @transform_0(%arg0: i32) -> (i32, i32) {
    %c0_i32 = arith.constant 0 : i32
    %c0_i32_0 = arith.constant 0 : i32
    return %arg0, %c0_i32 : i32, i32
  }
  func.func @transform_1(%arg0: i32) -> (i32, i32) {
    %c0_i32 = arith.constant 0 : i32
    %c0_i32_0 = arith.constant 0 : i32
    %c0_i32_1 = arith.constant 0 : i32
    return %c0_i32, %c0_i32_0 : i32, i32
  }
  func.func @transform_2(%arg0: i32) -> (i32, i32) {
    %c0_i32 = arith.constant 0 : i32
    %c0_i32_0 = arith.constant 0 : i32
    %c0_i32_1 = arith.constant 0 : i32
    return %c0_i32, %c0_i32_0 : i32, i32
  }
  func.func @transform_3(%arg0: i32) -> (i32, i32) {
    %c0_i32 = arith.constant 0 : i32
    %c0_i32_0 = arith.constant 0 : i32
    %c0_i32_1 = arith.constant 0 : i32
    return %c0_i32, %c0_i32_0 : i32, i32
  }
  func.func @transform_4(%arg0: i32) -> (i32, i32) {
    %c0_i32 = arith.constant 0 : i32
    %c0_i32_0 = arith.constant 0 : i32
    %c0_i32_1 = arith.constant 0 : i32
    return %c0_i32, %c0_i32_0 : i32, i32
  }
  func.func @transform_5(%arg0: i32) -> (i32, i32) {
    %c0_i32 = arith.constant 0 : i32
    %c0_i32_0 = arith.constant 0 : i32
    return %arg0, %c0_i32 : i32, i32
  }
}

</mosaic_0001>

<llo_original>
// kernel: fcn_forward.1
$region0: #{fcn_forward.1}
  #allocation0 [shape = 'u32[]', space=smem, size = 0x4, offset = 0x4, fixed_abs, tag = 'smem constant byte address 0x4 - core index']
  #allocation1 [shape = 'u32[144,128]{1,0:T(1,128)}', space=vmem, size = 0x12000, scoped, tag = 'internal scratch']
  %s0 = inlined_call_operand.vmem [shape: bf16[8,16], index: 0, kind: input, shape index: {}]
  %s1 = inlined_call_operand.vmem [shape: bf16[16,32], index: 1, kind: input, shape index: {}]
  %s2 = inlined_call_operand.vmem [shape: f32[1,32], index: 2, kind: input, shape index: {}]
  %s3 = inlined_call_operand.vmem [shape: bf16[32,8], index: 3, kind: input, shape index: {}]
  %s4 = inlined_call_operand.vmem [shape: f32[1,8], index: 4, kind: input, shape index: {}]
  %s5 = inlined_call_operand.hbm [shape: f32[8,8], index: 5, kind: output, shape index: {}]
  %s6 = sld [smem:[#allocation0]]
  $region30: #{fcn_forward.1} parent=0
    _
  %s8 = ssub.s32 1, %s6
  %s9 = scalar_select 0, %s8, %s6
  $region1: #{fcn_forward.1} parent=0
    #allocation2 [shape = 'u8[4096]{0}', space=vmem, size = 0x1000, scoped, tag = 'output window, operand 0, single buffered']
    #allocation3 [shape = 's32[1]{0}', space=sflag, size = 0x4, scoped, tag = 'scoped memory for fcn_forward.1']
    %10 = vsyncpa [#allocation3], 0
    // Predicated region
    $region2: #{fcn_forward.1} parent=1 // pred_check
      _
    $region3: #{fcn_forward.1} parent=1 // pred_check_branch
      %12 = sbr.rel (0) target = $region5
    $region4: #{fcn_forward.1} parent=1 // pred_region
      _
    $region5: #{fcn_forward.1} parent=1 // pred_fallthru
      _
    // Predicated region
    $region6: #{fcn_forward.1} parent=1 // pred_check
      _
    $region7: #{fcn_forward.1} parent=1 // pred_check_branch
      %14 = sbr.rel (0) target = $region9
    $region8: #{fcn_forward.1} parent=1 // pred_region
      _
    $region9: #{fcn_forward.1} parent=1 // pred_fallthru
      _
    // Predicated region
    $region10: #{fcn_forward.1} parent=1 // pred_check
      _
    $region11: #{fcn_forward.1} parent=1 // pred_check_branch
      %16 = sbr.rel (0) target = $region13
    $region12: #{fcn_forward.1} parent=1 // pred_region
      _
    $region13: #{fcn_forward.1} parent=1 // pred_fallthru
      _
    // Predicated region
    $region14: #{fcn_forward.1} parent=1 // pred_check
      _
    $region15: #{fcn_forward.1} parent=1 // pred_check_branch
      %18 = sbr.rel (0) target = $region17
    $region16: #{fcn_forward.1} parent=1 // pred_region
      _
    $region17: #{fcn_forward.1} parent=1 // pred_fallthru
      _
    // Predicated region
    $region18: #{fcn_forward.1} parent=1 // pred_check
      _
    $region19: #{fcn_forward.1} parent=1 // pred_check_branch
      %20 = sbr.rel (0) target = $region21
    $region20: #{fcn_forward.1} parent=1 // pred_region
      _
    $region21: #{fcn_forward.1} parent=1 // pred_fallthru
      _
    %v22 = vld [vmem:[%s2] sm:$0x1]
    %v23 = vld [vmem:[%s0] sm:$0xf]
    %v24 = vld [vmem:[%s1] sm:$0xf]
    %v25 = vld [vmem:[%s1 + $0x4] sm:$0xf]
    %v28 = vunpack.c.l.b16 %v24
    %v29 = vunpack.c.l.b16 %v25
    %v30 = vpack.c.b16 %v29, %v28
    %vm32 = vcmask 130048
    %v34 = vsel %vm32, %v23, 0
    %36 = vmatprep.subr.bf16.mxu0 0
    %37 = vmatpush1.bf16.msra.mxu0 0
    %38 = vmatprep.subr.bf16.mxu0 0
    %39 = vmatpush1.bf16.msra.mxu0 0
    %40 = vmatprep.subr.bf16.mxu0 0
    %41 = vmatpush1.bf16.msra.mxu0 0
    %42 = vmatprep.subr.bf16.mxu0 0
    %43 = vmatpush1.bf16.msra.mxu0 0
    %44 = vmatprep.subr.bf16.mxu0 0
    %45 = vmatpush1.bf16.msra.mxu0 0
    %46 = vmatprep.subr.bf16.mxu0 0
    %47 = vmatpush1.bf16.msra.mxu0 0
    %48 = vmatprep.subr.bf16.mxu0 0
    %49 = vmatpush1.bf16.msra.mxu0 0
    %50 = vmatprep.subr.bf16.mxu0 0
    %51 = vmatpush1.bf16.msra.mxu0 %v30
    %52 = vmatprep.subr.bf16.mxu0 0
    %53 = vmatpush2.bf16.msra.mxu0 0
    %54 = vmatprep.subr.bf16.mxu0 0
    %55 = vmatpush2.bf16.msra.mxu0 0
    %56 = vmatprep.subr.bf16.mxu0 0
    %57 = vmatpush2.bf16.msra.mxu0 0
    %58 = vmatprep.subr.bf16.mxu0 0
    %59 = vmatpush2.bf16.msra.mxu0 0
    %60 = vmatprep.subr.bf16.mxu0 0
    %61 = vmatpush2.bf16.msra.mxu0 0
    %62 = vmatprep.subr.bf16.mxu0 0
    %63 = vmatpush2.bf16.msra.mxu0 0
    %64 = vmatprep.subr.bf16.mxu0 0
    %65 = vmatpush2.bf16.msra.mxu0 0
    %66 = vmatprep.subr.bf16.mxu0 0
    %67 = vmatpush2.bf16.msra.mxu0 0
    %68 = vmatprep.mubr.bf16.mxu0 0
    %69 = vmatmul.mubr.bf16.gmra.mxu0 %v34
    %v70 = vpop.f32.mrf.mxu0
    %v71 = vadd.f32 0.0, %v70
    %v72 = vpop.f32.mrf.mxu0
    %v73 = vpop.f32.mrf.mxu0
    %v74 = vpop.f32.mrf.mxu0
    %75 = vdwg.mxu0
    %v77 = vlaneseq
    %v78 = vshrl.u32 %v77, 7
    %v79 = vsub.s32 0, %v78
    %v80 = vrot.slane %v22, %v79
    %v82 = vadd.f32 %v80, %v71
    %v83 = vmax.f32 %v82, 0.0
    %v84 = vld [vmem:[%s4] sm:$0x1]
    %v85 = vpack.c.bf16 %v83, %v83
    %v86 = vld [vmem:[%s3] sm:$0xf]
    %v87 = vld [vmem:[%s3 + $0x4] sm:$0xf]
    %v88 = vld [vmem:[%s3 + $0x8] sm:$0xf]
    %v89 = vld [vmem:[%s3 + $0xc] sm:$0xf]
    %v94 = vunpack.c.l.b16 %v86
    %v95 = vunpack.c.l.b16 %v87
    %v96 = vunpack.c.l.b16 %v88
    %v97 = vunpack.c.l.b16 %v89
    %v98 = vpack.c.b16 %v95, %v94
    %v99 = vpack.c.b16 %v97, %v96
    %vm102 = vcmask 261120
    %v104 = vsel %vm102, %v85, 0
    %106 = vmatprep.subr.bf16.mxu0 0
    %107 = vmatpush1.bf16.msra.mxu0 0
    %108 = vmatprep.subr.bf16.mxu0 0
    %109 = vmatpush1.bf16.msra.mxu0 0
    %110 = vmatprep.subr.bf16.mxu0 0
    %111 = vmatpush1.bf16.msra.mxu0 0
    %112 = vmatprep.subr.bf16.mxu0 0
    %113 = vmatpush1.bf16.msra.mxu0 0
    %114 = vmatprep.subr.bf16.mxu0 0
    %115 = vmatpush1.bf16.msra.mxu0 0
    %116 = vmatprep.subr.bf16.mxu0 0
    %117 = vmatpush1.bf16.msra.mxu0 0
    %118 = vmatprep.subr.bf16.mxu0 0
    %119 = vmatpush1.bf16.msra.mxu0 %v99
    %120 = vmatprep.subr.bf16.mxu0 0
    %121 = vmatpush1.bf16.msra.mxu0 %v98
    %122 = vmatprep.subr.bf16.mxu0 0
    %123 = vmatpush2.bf16.msra.mxu0 0
    %124 = vmatprep.subr.bf16.mxu0 0
    %125 = vmatpush2.bf16.msra.mxu0 0
    %126 = vmatprep.subr.bf16.mxu0 0
    %127 = vmatpush2.bf16.msra.mxu0 0
    %128 = vmatprep.subr.bf16.mxu0 0
    %129 = vmatpush2.bf16.msra.mxu0 0
    %130 = vmatprep.subr.bf16.mxu0 0
    %131 = vmatpush2.bf16.msra.mxu0 0
    %132 = vmatprep.subr.bf16.mxu0 0
    %133 = vmatpush2.bf16.msra.mxu0 0
    %134 = vmatprep.subr.bf16.mxu0 0
    %135 = vmatpush2.bf16.msra.mxu0 0
    %136 = vmatprep.subr.bf16.mxu0 0
    %137 = vmatpush2.bf16.msra.mxu0 0
    %138 = vmatprep.mubr.bf16.mxu0 0
    %139 = vmatmul.mubr.bf16.gmra.mxu0 %v104
    %v140 = vpop.f32.mrf.mxu0
    %v141 = vadd.f32 0.0, %v140
    %v142 = vpop.f32.mrf.mxu0
    %v143 = vpop.f32.mrf.mxu0
    %v144 = vpop.f32.mrf.mxu0
    %145 = vdwg.mxu0
    %v147 = vlaneseq
    %v148 = vshrl.u32 %v147, 7
    %v149 = vsub.s32 0, %v148
    %v150 = vrot.slane %v84, %v149
    %v152 = vadd.f32 %v150, %v141
    %v153 = vxor.u32 %v152, 2147483648
    %v154 = vmul.f32 %v153, 1.442695
    %v155 = vpow.pop %v154
    %v156 = vadd.f32 %v155, 1.0
    %v157 = vrcp.pop %v156
    %v158 = vmul.f32 1.0, %v157
    %vm159 = vcmask 64512
    %160 = vst.msk [vmem:[#allocation2] sm:$0xff] %vm159, %v158
    // Predicated region
    $region22: #{fcn_forward.1} parent=1 // pred_check
      _
    $region23: #{fcn_forward.1} parent=1 // pred_check_branch
      %162 = sbr.rel (0) target = $region25
    $region24: #{fcn_forward.1} parent=1 // pred_region
      %s164 = ssub.s32 128, 128
      %165 = vsyncadd [#allocation3], %s164
      %s167 = sshll.u32 [#allocation2], 4
      %s168 = int_to_ptr.vmem [resolvable:$true] %s167
      %170 = dma.vmem_to_hbm [thread:$0]  %s168, 128, %s5, [#allocation3]
    $region25: #{fcn_forward.1} parent=1 // pred_fallthru
      _
    // Predicated region
    $region26: #{fcn_forward.1} parent=1 // pred_check
      _
    $region27: #{fcn_forward.1} parent=1 // pred_check_branch
      %172 = sbr.rel (0) target = $region29
    $region28: #{fcn_forward.1} parent=1 // pred_region
      %173 = dma.done [#allocation3], 128
    $region29: #{fcn_forward.1} parent=1 // pred_fallthru
      _
    %174 = vsyncpa [#allocation3], 1

</llo_original>
